<compile_context>
chip_gen: v7x
topology: tpu7x:2x2x1
jax: 0.10.0
libtpu: 0.0.40
codegen_flags: <defaults>
</compile_context>

<pallas_src>
import jax
import jax.numpy as jnp
from jax.experimental import pallas as pl
from jax.experimental.pallas import tpu as pltpu

_MIB = 1024 * 1024


def _wtalc_kernel(conv_ref, flow_ref, w_rgb_ref, w_flow_ref, b_fc_ref,
                  w_cls_ref, b_cls_ref, out_ref, h_acc_ref):
    """Grid = (row tiles, F chunks); axis 1 (k) is the fc-input reduction axis.

    conv_ref : (tile_n, S, tile_f)  conv feature chunk, F on lanes (bf16 / f32)
    flow_ref : (tile_n, tile_f)     flow feature chunk (native dtype)
    w_rgb_ref, w_flow_ref : (F, F)  full fc weight halves, grid-invariant,
        pre-transposed so cat([rgb, flow]) @ W_fc^T ==
        sum_k rgb_k @ w_rgb[k-band] + flow_k @ w_flow[k-band].
        w_rgb additionally carries the folded 1/S pooling scale.
    b_fc_ref : (1, F)   f32
    w_cls_ref: (F, C)   bf16  label_projection weight^T
    b_cls_ref: (1, C)   f32
    out_ref  : (tile_n, C) f32  class_wise_activations (written at last k)
    h_acc_ref: (tile_n, F) f32  VMEM accumulator for the fc output
    """
    k = pl.program_id(1)
    tile_f = flow_ref.shape[1]

    @pl.when(k == 0)
    def _():
        h_acc_ref[...] = jnp.zeros_like(h_acc_ref)

    # AdaptiveAvgPool2d((1,1)) + view == mean over the flattened spatial axis.
    # F stays on lanes -> lane-dense loads and VALU adds (no XLU relayout).
    # The 1/S scale is pre-folded into w_rgb.  f32 reduce, bf16 MXU operands.
    rgb = jnp.sum(conv_ref[...], axis=1, dtype=jnp.float32)     # (tile_n, tile_f)
    rgb = rgb.astype(w_rgb_ref.dtype)
    flow = flow_ref[...].astype(w_flow_ref.dtype)

    # Grid-invariant resident weights: slice the k-th row band in-kernel.
    f0 = pl.multiple_of(k * tile_f, tile_f)
    h_acc_ref[...] += (
        jnp.dot(rgb, w_rgb_ref[pl.ds(f0, tile_f), :],
                preferred_element_type=jnp.float32)
        + jnp.dot(flow, w_flow_ref[pl.ds(f0, tile_f), :],
                  preferred_element_type=jnp.float32))

    @pl.when(k == pl.num_programs(1) - 1)
    def _():
        # fc bias + ReLU (dropout = identity in eval), then label_projection.
        h = jnp.maximum(h_acc_ref[...] + b_fc_ref[...], 0.0)       # f32
        out_ref[...] = (
            jnp.dot(h.astype(w_cls_ref.dtype), w_cls_ref[...],
                    preferred_element_type=jnp.float32)
            + b_cls_ref[...])


def _round_up(x, m):
    return -(-x // m) * m


def _physical_vmem_bytes():
    """Best-effort physical VMEM query; conservative 64 MiB fallback."""
    try:
        info = pltpu.get_tpu_info()
        for attr in ("vmem_capacity_bytes", "vmem_size_bytes", "vmem_bytes"):
            v = getattr(info, attr, None)
            if v:
                return int(v)
    except Exception:
        pass
    return 64 * _MIB


def _pick_row_tile(n, requested):
    """Largest multiple-of-8 divisor of n <= requested, preferring >= 2 row
    tiles so both v7x TensorCores get work on the 'parallel' axis."""
    requested = max(8, min(requested, n))
    divs = [d for d in range(8, requested + 1, 8) if n % d == 0]
    if not divs:
        return n                       # single full-row block (block == dim is legal)
    for d in reversed(divs):
        if n // d >= 2:
            return d
    return divs[-1]


def _pick_feat_tile(f, requested):
    """Largest multiple-of-128 divisor of f <= requested (lane alignment)."""
    requested = max(128, min(requested, f))
    divs = [d for d in range(128, requested + 1, 128) if f % d == 0]
    return divs[-1] if divs else f


def _vmem_limit_bytes(tile_n, tile_f, F, S, C, conv_itemsize, flow_itemsize,
                      w_itemsize, phys_vmem):
    """Scoped-VMEM budget: streamed conv/flow chunks (x2 buffers), resident fc
    weights, biases, accumulator, output — with a generation-aware cap."""
    s_pad = _round_up(S, 8)
    tf = _round_up(tile_f, 128)
    tn = _round_up(tile_n, 8)
    f_lane = _round_up(F, 128)
    f_sub = _round_up(F, 8)
    c_lane = _round_up(C, 128)
    conv = 2 * tile_n * s_pad * tf * conv_itemsize       # double-buffered stream
    flow = 2 * tn * tf * flow_itemsize
    w_fc = 2 * 2 * f_sub * f_lane * w_itemsize           # grid-invariant, 2-buffered
    w_cls = 2 * f_sub * c_lane * w_itemsize
    biases = 2 * 8 * (f_lane + c_lane) * 4
    acc = tn * f_lane * 4
    out = 2 * tn * c_lane * 4
    budget = conv + flow + w_fc + w_cls + biases + acc + out
    # ~48 MiB cap on 64-MiB-VMEM chips (v7x), ~96 MiB on 128-MiB chips.
    cap = min(phys_vmem - 16 * _MIB, 96 * _MIB)
    return int(min(max(budget * 3 // 2, 32 * _MIB), cap))


def wtalc_forward(conv_feats, flow_feats, params, *, tile_n=256, tile_f=512,
                  compute_dtype=jnp.bfloat16):
    """conv_feats: (B, T, H, W, F) channel-last backbone maps (bf16 or f32);
    flow_feats: (B, T, F); returns (B, T, C) f32 class_wise_activations."""
    B, T, H, W, F = conv_feats.shape
    N = B * T
    S = H * W
    C = params["w_cls"].shape[1]

    phys_vmem = _physical_vmem_bytes()
    if phys_vmem <= 64 * _MIB:
        # v7x: smaller VMEM -> keep F chunks (and conv stream buffers) smaller.
        tile_f = min(tile_f, 256)

    tile_n = _pick_row_tile(N, tile_n)
    tile_f = _pick_feat_tile(F, tile_f)

    # No host-side cast/relayout of the conv stream: the reshape is metadata-
    # only and the kernel reads the backbone maps at native dtype exactly once.
    conv_flat = conv_feats.reshape(N, S, F)
    flow_flat = flow_feats.reshape(N, F)

    # bf16 MXU operands for the weights (f32 accumulation everywhere); fold
    # the 1/S AdaptiveAvgPool scale into w_rgb so the kernel only sums.
    w_rgb = (params["w_rgb"].astype(jnp.float32) * jnp.float32(1.0 / S)
             ).astype(compute_dtype)
    w_flow = params["w_flow"].astype(compute_dtype)
    w_cls = params["w_cls"].astype(compute_dtype)
    b_fc = params["b_fc"].astype(jnp.float32).reshape(1, F)
    b_cls = params["b_cls"].astype(jnp.float32).reshape(1, C)

    grid = (N // tile_n, F // tile_f)
    conv_isz = conv_flat.dtype.itemsize
    flow_isz = flow_flat.dtype.itemsize
    w_isz = jnp.dtype(compute_dtype).itemsize

    cost = pl.CostEstimate(
        flops=N * F * S                       # spatial pooling
              + 2 * N * (2 * F) * F           # fc
              + 2 * N * F * C,                # label projection
        transcendentals=0,
        bytes_accessed=conv_flat.size * conv_isz + flow_flat.size * flow_isz
                       + (w_rgb.size + w_flow.size + w_cls.size) * w_isz
                       + (b_fc.size + b_cls.size + N * C) * 4)

    out = pl.pallas_call(
        _wtalc_kernel,
        out_shape=jax.ShapeDtypeStruct((N, C), jnp.float32),
        grid_spec=pltpu.PrefetchScalarGridSpec(
            num_scalar_prefetch=0,
            grid=grid,
            in_specs=[
                # conv stream: F on lanes, S on sublanes
                pl.BlockSpec((tile_n, S, tile_f), lambda i, k: (i, 0, k)),
                pl.BlockSpec((tile_n, tile_f), lambda i, k: (i, k)),   # flow
                pl.BlockSpec((F, F), lambda i, k: (0, 0)),   # w_rgb (resident)
                pl.BlockSpec((F, F), lambda i, k: (0, 0)),   # w_flow (resident)
                pl.BlockSpec((1, F), lambda i, k: (0, 0)),   # b_fc
                pl.BlockSpec((F, C), lambda i, k: (0, 0)),   # w_cls
                pl.BlockSpec((1, C), lambda i, k: (0, 0)),   # b_cls
            ],
            out_specs=pl.BlockSpec((tile_n, C), lambda i, k: (i, 0)),
            scratch_shapes=[pltpu.VMEM((tile_n, F), jnp.float32)],
        ),
        compiler_params=pltpu.CompilerParams(
            dimension_semantics=("parallel", "arbitrary"),
            vmem_limit_bytes=_vmem_limit_bytes(
                tile_n, tile_f, F, S, C, conv_isz, flow_isz, w_isz, phys_vmem)),
        cost_estimate=cost,
    )(conv_flat, flow_flat, w_rgb, w_flow, b_fc, w_cls, b_cls)

    return out.reshape(B, T, C)


def reference(conv_feats, flow_feats, params):
    """Pure-JAX f32 reference replicating the PyTorch forward (eval mode).
    conv_feats is channel-last (B, T, H, W, F)."""
    rgb = conv_feats.astype(jnp.float32).mean(axis=(2, 3))        # (B, T, F)
    feats = jnp.concatenate([rgb, flow_feats.astype(jnp.float32)], axis=-1)
    wt_fc = jnp.concatenate([params["w_rgb"], params["w_flow"]], axis=0)
    h = jnp.maximum(feats @ wt_fc + params["b_fc"], 0.0)
    return h @ params["w_cls"] + params["b_cls"]


if __name__ == "__main__":
    # Small shapes (module defaults are feature_dim=2048, 7x7 conv maps,
    # num_classes=1): batch=2, seq=16, feature_dim=256, spatial 4x4, classes=4.
    B, T, F, H, W, C = 2, 16, 256, 4, 4, 4

    key = jax.random.PRNGKey(0)
    k1, k2, k3, k4, k5, k6 = jax.random.split(key, 6)

    # Backbone conv maps channel-last (natural TPU conv layout) and already
    # bf16 — consumed by the kernel with no extra cast / relayout pass.
    conv_feats = jax.random.normal(k1, (B, T, H, W, F), jnp.float32
                                   ).astype(jnp.bfloat16)
    flow_feats = jax.random.normal(k2, (B, T, F), jnp.float32)

    # Deterministic init mimicking nn.Linear uniform(-1/sqrt(in), 1/sqrt(in)).
    s_fc = 1.0 / (2.0 * F) ** 0.5
    wt_fc = jax.random.uniform(k3, (2 * F, F), jnp.float32, -s_fc, s_fc)   # fc.weight^T
    b_fc = jax.random.uniform(k4, (1, F), jnp.float32, -s_fc, s_fc)        # fc.bias
    s_cls = 1.0 / F ** 0.5
    w_cls = jax.random.uniform(k5, (F, C), jnp.float32, -s_cls, s_cls)     # label_projection.weight^T
    b_cls = jax.random.uniform(k6, (1, C), jnp.float32, -s_cls, s_cls)     # label_projection.bias

    params = dict(w_rgb=wt_fc[:F], w_flow=wt_fc[F:],
                  b_fc=b_fc, w_cls=w_cls, b_cls=b_cls)

    # tile_n=16 row tiles x tile_f=128 feature chunks -> grid (2, 2): exercises
    # both the parallel row axis and the F-reduction / accumulator path.
    out = wtalc_forward(conv_feats, flow_feats, params, tile_n=16, tile_f=128)
    jax.block_until_ready(out)

    ref = reference(conv_feats, flow_feats, params)
    assert out.shape == (B, T, C)
    if not jnp.allclose(out, ref, rtol=3e-2, atol=3e-2):
        # bf16 MXU operands vs f32 reference: tolerance is intentional.
        raise AssertionError("Pallas kernel output mismatches JAX reference")

    print("KERNEL_OK")
</pallas_src>

<mosaic_0001>
module attributes {stable_mosaic.version = 11 : i64} {
  func.func @_wtalc_kernel(%arg0: i32, %arg1: i32, %arg2: memref<16x16x128xbf16, #tpu.memory_space<vmem>>, %arg3: memref<16x128xf32, #tpu.memory_space<vmem>>, %arg4: memref<256x256xbf16, #tpu.memory_space<vmem>>, %arg5: memref<256x256xbf16, #tpu.memory_space<vmem>>, %arg6: memref<1x256xf32, #tpu.memory_space<vmem>>, %arg7: memref<256x4xbf16, #tpu.memory_space<vmem>>, %arg8: memref<1x4xf32, #tpu.memory_space<vmem>>, %arg9: memref<16x4xf32, #tpu.memory_space<vmem>>, %arg10: memref<16x256xf32, #tpu.memory_space<vmem>>) attributes {dimension_semantics = [#tpu.dimension_semantics<parallel>, #tpu.dimension_semantics<arbitrary>], iteration_bounds = array<i64: 2, 2>, scalar_prefetch = 0 : i64, scratch_operands = 1 : i64, tpu.core_type = #tpu.core_type<tc>, window_params = [{transform_indices = @transform_0, window_bounds = array<i64: 16, 16, 128>}, {transform_indices = @transform_1, window_bounds = array<i64: 16, 128>}, {pipeline_mode = #tpu.pipeline_mode<synchronous>, transform_indices = @transform_2, window_bounds = array<i64: 256, 256>}, {pipeline_mode = #tpu.pipeline_mode<synchronous>, transform_indices = @transform_3, window_bounds = array<i64: 256, 256>}, {pipeline_mode = #tpu.pipeline_mode<synchronous>, transform_indices = @transform_4, window_bounds = array<i64: 1, 256>}, {pipeline_mode = #tpu.pipeline_mode<synchronous>, transform_indices = @transform_5, window_bounds = array<i64: 256, 4>}, {pipeline_mode = #tpu.pipeline_mode<synchronous>, transform_indices = @transform_6, window_bounds = array<i64: 1, 4>}, {transform_indices = @transform_7, window_bounds = array<i64: 16, 4>}]} {
    %c0_i32 = arith.constant 0 : i32
    %0 = arith.cmpi eq, %arg1, %c0_i32 : i32
    %1 = arith.extui %0 : i1 to i32
    %c0_i32_0 = arith.constant 0 : i32
    %2 = arith.cmpi ne, %1, %c0_i32_0 : i32
    scf.if %2 {
      %cst_14 = arith.constant 0.000000e+00 : f32
      %24 = vector.broadcast %cst_14 : f32 to vector<16x256xf32>
      %c0_15 = arith.constant 0 : index
      %c0_16 = arith.constant 0 : index
      %25 = vector.load %arg10[%c0_15, %c0_16] : memref<16x256xf32, #tpu.memory_space<vmem>>, vector<16x256xf32>
      tpu.vector_store %arg10[%c0_15, %c0_16], %24 {strides = array<i32>} : memref<16x256xf32, #tpu.memory_space<vmem>>, vector<16x256xf32>,
    } else {
    }
    %c0 = arith.constant 0 : index
    %c0_1 = arith.constant 0 : index
    %c0_2 = arith.constant 0 : index
    %3 = vector.load %arg2[%c0, %c0_1, %c0_2] : memref<16x16x128xbf16, #tpu.memory_space<vmem>>, vector<16x16x128xbf16>
    %4 = arith.extf %3 : vector<16x16x128xbf16> to vector<16x16x128xf32>
    %cst = arith.constant dense<0.000000e+00> : vector<16x128xf32>
    %5 = vector.multi_reduction <add>, %4, %cst [1] : vector<16x16x128xf32> to vector<16x128xf32>
    %6 = arith.truncf %5 : vector<16x128xf32> to vector<16x128xbf16>
    %c0_3 = arith.constant 0 : index
    %c0_4 = arith.constant 0 : index
    %7 = vector.load %arg3[%c0_3, %c0_4] : memref<16x128xf32, #tpu.memory_space<vmem>>, vector<16x128xf32>
    %8 = arith.truncf %7 : vector<16x128xf32> to vector<16x128xbf16>
    %c128_i32 = arith.constant 128 : i32
    %9 = arith.muli %arg1, %c128_i32 : i32
    %10 = tpu.assume_multiple %9, 128 : i32
    %c0_5 = arith.constant 0 : index
    %c0_6 = arith.constant 0 : index
    %11 = vector.load %arg10[%c0_5, %c0_6] : memref<16x256xf32, #tpu.memory_space<vmem>>, vector<16x256xf32>
    %12 = arith.index_cast %10 : i32 to index
    %c0_7 = arith.constant 0 : index
    %13 = vector.load %arg4[%12, %c0_7] : memref<256x256xbf16, #tpu.memory_space<vmem>>, vector<128x256xbf16>
    %cst_8 = arith.constant dense<0.000000e+00> : vector<16x256xf32>
    %14 = tpu.matmul %6, %13, %cst_8 {dimension_numbers = #tpu.dot_dimension_numbers<[1], [0], [0], [1], [0, 0, 1, 1], [], []>} : vector<16x128xbf16>, vector<128x256xbf16>, vector<16x256xf32> -> vector<16x256xf32>
    %15 = arith.index_cast %10 : i32 to index
    %c0_9 = arith.constant 0 : index
    %16 = vector.load %arg5[%15, %c0_9] : memref<256x256xbf16, #tpu.memory_space<vmem>>, vector<128x256xbf16>
    %cst_10 = arith.constant dense<0.000000e+00> : vector<16x256xf32>
    %17 = tpu.matmul %8, %16, %cst_10 {dimension_numbers = #tpu.dot_dimension_numbers<[1], [0], [0], [1], [0, 0, 1, 1], [], []>} : vector<16x128xbf16>, vector<128x256xbf16>, vector<16x256xf32> -> vector<16x256xf32>
    %18 = arith.addf %14, %17 : vector<16x256xf32>
    %19 = arith.addf %11, %18 : vector<16x256xf32>
    %c0_11 = arith.constant 0 : index
    %c0_12 = arith.constant 0 : index
    %20 = vector.load %arg10[%c0_11, %c0_12] : memref<16x256xf32, #tpu.memory_space<vmem>>, vector<16x256xf32>
    tpu.vector_store %arg10[%c0_11, %c0_12], %19 {strides = array<i32>} : memref<16x256xf32, #tpu.memory_space<vmem>>, vector<16x256xf32>,
    %c1_i32 = arith.constant 1 : i32
    %21 = arith.cmpi eq, %arg1, %c1_i32 : i32
    %22 = arith.extui %21 : i1 to i32
    %c0_i32_13 = arith.constant 0 : i32
    %23 = arith.cmpi ne, %22, %c0_i32_13 : i32
    scf.if %23 {
      %c0_14 = arith.constant 0 : index
      %c0_15 = arith.constant 0 : index
      %24 = vector.load %arg10[%c0_14, %c0_15] : memref<16x256xf32, #tpu.memory_space<vmem>>, vector<16x256xf32>
      %c0_16 = arith.constant 0 : index
      %c0_17 = arith.constant 0 : index
      %25 = vector.load %arg6[%c0_16, %c0_17] : memref<1x256xf32, #tpu.memory_space<vmem>>, vector<1x256xf32>
      %26 = vector.broadcast %25 : vector<1x256xf32> to vector<16x256xf32>
      %27 = arith.addf %24, %26 : vector<16x256xf32>
      %cst_18 = arith.constant 0.000000e+00 : f32
      %28 = vector.broadcast %cst_18 : f32 to vector<16x256xf32>
      %29 = arith.maximumf %27, %28 : vector<16x256xf32>
      %30 = arith.truncf %29 : vector<16x256xf32> to vector<16x256xbf16>
      %c0_19 = arith.constant 0 : index
      %c0_20 = arith.constant 0 : index
      %31 = vector.load %arg7[%c0_19, %c0_20] : memref<256x4xbf16, #tpu.memory_space<vmem>>, vector<256x4xbf16>
      %cst_21 = arith.constant dense<0.000000e+00> : vector<16x4xf32>
      %32 = tpu.matmul %30, %31, %cst_21 {dimension_numbers = #tpu.dot_dimension_numbers<[1], [0], [0], [1], [0, 0, 1, 1], [], []>} : vector<16x256xbf16>, vector<256x4xbf16>, vector<16x4xf32> -> vector<16x4xf32>
      %c0_22 = arith.constant 0 : index
      %c0_23 = arith.constant 0 : index
      %33 = vector.load %arg8[%c0_22, %c0_23] : memref<1x4xf32, #tpu.memory_space<vmem>>, vector<1x4xf32>
      %34 = vector.broadcast %33 : vector<1x4xf32> to vector<16x4xf32>
      %35 = arith.addf %32, %34 : vector<16x4xf32>
      %c0_24 = arith.constant 0 : index
      %c0_25 = arith.constant 0 : index
      %36 = vector.load %arg9[%c0_24, %c0_25] : memref<16x4xf32, #tpu.memory_space<vmem>>, vector<16x4xf32>
      tpu.vector_store %arg9[%c0_24, %c0_25], %35 {strides = array<i32>} : memref<16x4xf32, #tpu.memory_space<vmem>>, vector<16x4xf32>,
    } else {
    }
    return
  }
  func.func @transform_0(%arg0: i32, %arg1: i32) -> (i32, i32, i32) {
    %c0_i32 = arith.constant 0 : i32
    %c0_i32_0 = arith.constant 0 : i32
    return %arg0, %c0_i32, %arg1 : i32, i32, i32
  }
  func.func @transform_1(%arg0: i32, %arg1: i32) -> (i32, i32) {
    %c0_i32 = arith.constant 0 : i32
    return %arg0, %arg1 : i32, i32
  }
  func.func @transform_2(%arg0: i32, %arg1: i32) -> (i32, i32) {
    %c0_i32 = arith.constant 0 : i32
    %c0_i32_0 = arith.constant 0 : i32
    %c0_i32_1 = arith.constant 0 : i32
    return %c0_i32, %c0_i32_0 : i32, i32
  }
  func.func @transform_3(%arg0: i32, %arg1: i32) -> (i32, i32) {
    %c0_i32 = arith.constant 0 : i32
    %c0_i32_0 = arith.constant 0 : i32
    %c0_i32_1 = arith.constant 0 : i32
    return %c0_i32, %c0_i32_0 : i32, i32
  }
  func.func @transform_4(%arg0: i32, %arg1: i32) -> (i32, i32) {
    %c0_i32 = arith.constant 0 : i32
    %c0_i32_0 = arith.constant 0 : i32
    %c0_i32_1 = arith.constant 0 : i32
    return %c0_i32, %c0_i32_0 : i32, i32
  }
  func.func @transform_5(%arg0: i32, %arg1: i32) -> (i32, i32) {
    %c0_i32 = arith.constant 0 : i32
    %c0_i32_0 = arith.constant 0 : i32
    %c0_i32_1 = arith.constant 0 : i32
    return %c0_i32, %c0_i32_0 : i32, i32
  }
  func.func @transform_6(%arg0: i32, %arg1: i32) -> (i32, i32) {
    %c0_i32 = arith.constant 0 : i32
    %c0_i32_0 = arith.constant 0 : i32
    %c0_i32_1 = arith.constant 0 : i32
    return %c0_i32, %c0_i32_0 : i32, i32
  }
  func.func @transform_7(%arg0: i32, %arg1: i32) -> (i32, i32) {
    %c0_i32 = arith.constant 0 : i32
    %c0_i32_0 = arith.constant 0 : i32
    return %arg0, %c0_i32 : i32, i32
  }
}

</mosaic_0001>

<llo_original>
// kernel: tpu_custom_call.1
$region0: #{tpu_custom_call.1}
  #allocation0 [shape = 'u32[]', space=smem, size = 0x4, offset = 0x4, fixed_abs, tag = 'smem constant byte address 0x4 - core index']
  #allocation1 [shape = 'u32[144,128]{1,0:T(1,128)}', space=vmem, size = 0x12000, scoped, tag = 'internal scratch']
  #allocation2 [shape = 'f32[16,256]{1,0:T(8,128)}', space=vmem, size = 0x4000, scoped, tag = 'scratch operand']
  %s0 = inlined_call_operand.hbm [shape: bf16[32,16,256], index: 0, kind: input, shape index: {}]
  %s1 = inlined_call_operand.vmem [shape: f32[32,256], index: 1, kind: input, shape index: {}]
  %s2 = inlined_call_operand.hbm [shape: bf16[256,256], index: 2, kind: input, shape index: {}]
  %s3 = inlined_call_operand.hbm [shape: bf16[256,256], index: 3, kind: input, shape index: {}]
  %s4 = inlined_call_operand.vmem [shape: f32[1,256], index: 4, kind: input, shape index: {}]
  %s5 = inlined_call_operand.vmem [shape: bf16[256,4], index: 5, kind: input, shape index: {}]
  %s6 = inlined_call_operand.vmem [shape: f32[1,4], index: 6, kind: input, shape index: {}]
  %s7 = inlined_call_operand.vmem [shape: f32[32,4], index: 7, kind: output, shape index: {}]
  %s8 = sld [smem:[#allocation0]]
  $region119: #{tpu_custom_call.1} parent=0
    _
  %s10 = ssub.s32 1, %s8
  %s11 = scalar_select 0, %s10, %s8
  $region1: #{tpu_custom_call.1} parent=0
    #allocation3 [shape = 'u8[131072]{0}', space=vmem, size = 0x20000, scoped, tag = 'input window, operand 0']
    #allocation4 [shape = 's32[2]{0}', space=sflag, size = 0x8, scoped, tag = 'scoped memory for tpu_custom_call.1']
    #allocation5 [shape = 'u8[16384]{0}', space=vmem, size = 0x4000, scoped, tag = 'input window, operand 1']
    #allocation6 [shape = 'u8[131072]{0}', space=vmem, size = 0x20000, scoped, tag = 'input window, operand 2, single buffered']
    #allocation7 [shape = 's32[1]{0}', space=sflag, size = 0x4, scoped, tag = 'scoped memory for tpu_custom_call.1']
    #allocation8 [shape = 'u8[131072]{0}', space=vmem, size = 0x20000, scoped, tag = 'input window, operand 3, single buffered']
    %12 = vsyncpa [#allocation4], 0
    %s13 = scalar_lea.sflag [#allocation4], 1
    %14 = vsyncpa %s13, 0
    %15 = vsyncpa [#allocation7], 0
    loop: start=0, step=1, limit=6
    $region2: #{tpu_custom_call.1} parent=1 // loop_pre_header
      _
    $region3: #{tpu_custom_call.1} parent=1 // loop_header
      %s17 = sphi 0, %s21
      %p18 = scmp.ge.s32.totalorder %s17, 6
      %s24 = sphi 0, %s36
      %s25 = sphi 0, %s32
      %s26 = sphi 0, %s24
      %s27 = sphi 0, %s25
      %s28 = sphi 0, %s26
      %s29 = sphi 0, %s27
      %s41 = sphi 0, %s43
      %s44 = sphi 0, %s41
      %s45 = sphi 0, %s44
      %s61 = sphi 0, %s45
      %s69 = sphi 0, %s71
      %s72 = sphi 0, %s69
      %s73 = sphi 0, %s72
      %s89 = sphi 0, %s73
      %s93 = sphi 0, %s93
      %s95 = sphi 0, %s93
      %s96 = sphi 0, %s95
      %s110 = sphi 0, %s96
      %s114 = sphi 0, %s114
      %s116 = sphi 0, %s114
      %s117 = sphi 0, %s116
      %s131 = sphi 0, %s117
      %s135 = sphi 0, %s135
      %s137 = sphi 0, %s135
      %s138 = sphi 0, %s137
      %s152 = sphi 0, %s138
      %s156 = sphi 0, %s156
      %s158 = sphi 0, %s156
      %s159 = sphi 0, %s158
      %s173 = sphi 0, %s159
      %s177 = sphi 0, %s177
      %s179 = sphi 0, %s177
      %s180 = sphi 0, %s179
      %s194 = sphi 0, %s180
      %s200 = sphi 0, %s202
      %s203 = sphi 0, %s200
      %s204 = sphi 0, %s203
      %s220 = sphi 0, %s204
    $region4: #{tpu_custom_call.1} parent=1 // loop_header_branch
      %20 = sbr.rel (%p18) target = $region8
    $region5: #{tpu_custom_call.1} parent=1 // loop_body
      %s22 = ssub.s32 %s17, 1
      %s23 = ssub.s32 %s17, 2
      %s30 = sadd.s32 1, %s25
      %p31 = scmp.ge.s32.totalorder %s30, 2
      %s32 = scalar_select %p31, 0, %s30
      %s33 = sadd.s32 1, %s24
      %s34 = scalar_select %p31, %s33, %s24
      %p35 = scmp.ge.s32.totalorder %s34, 2
      %s36 = scalar_select %p35, 0, %s34
      %s37 = ssub.s32 %s24, %s36
      %s38 = ssub.s32 %s25, %s32
      %s39 = sor.u32 %s37, %s38
      %p40 = scmp.eq.s32.totalorder %s39, 0
      %s42 = sadd.s32 %s41, 1
      %s43 = scalar_select %p40, %s41, %s42
      %p46 = pneg %p40
      %p47 = scmp.eq.s32.totalorder %s17, 3
      %p48 = por %p46, %p47
      %p49 = scmp.ne.s32.totalorder %s41, %s44
      %p50 = scmp.eq.s32.totalorder %s17, 0
      %p51 = por %p49, %p50
      %p52 = scmp.ne.s32.totalorder %s41, %s44
      %p53 = scmp.eq.s32.totalorder %s22, 3
      %p54 = por %p52, %p53
      %p55 = scmp.ne.s32.totalorder %s44, %s45
      %p56 = scmp.eq.s32.totalorder %s22, 0
      %p57 = por %p55, %p56
      %p58 = scmp.ne.s32.totalorder %s44, %s45
      %p59 = scmp.eq.s32.totalorder %s23, 3
      %p60 = por %p58, %p59
      %p62 = scmp.ne.s32.totalorder %s45, %s61
      %p63 = scmp.eq.s32.totalorder %s23, 0
      %p64 = por %p62, %p63
      %s65 = ssub.s32 %s24, %s36
      %s66 = ssub.s32 %s25, %s32
      %s67 = sor.u32 %s65, %s66
      %p68 = scmp.eq.s32.totalorder %s67, 0
      %s70 = sadd.s32 %s69, 1
      %s71 = scalar_select %p68, %s69, %s70
      %p74 = pneg %p68
      %p75 = scmp.eq.s32.totalorder %s17, 3
      %p76 = por %p74, %p75
      %p77 = scmp.ne.s32.totalorder %s69, %s72
      %p78 = scmp.eq.s32.totalorder %s17, 0
      %p79 = por %p77, %p78
      %p80 = scmp.ne.s32.totalorder %s69, %s72
      %p81 = scmp.eq.s32.totalorder %s22, 3
      %p82 = por %p80, %p81
      %p83 = scmp.ne.s32.totalorder %s72, %s73
      %p84 = scmp.eq.s32.totalorder %s22, 0
      %p85 = por %p83, %p84
      %p86 = scmp.ne.s32.totalorder %s72, %s73
      %p87 = scmp.eq.s32.totalorder %s23, 3
      %p88 = por %p86, %p87
      %p90 = scmp.ne.s32.totalorder %s73, %s89
      %p91 = scmp.eq.s32.totalorder %s23, 0
      %p92 = por %p90, %p91
      %s94 = sadd.s32 %s93, 1
      %p97 = scmp.eq.s32.totalorder %s17, 3
      %p98 = scmp.ne.s32.totalorder %s93, %s95
      %p99 = scmp.eq.s32.totalorder %s17, 0
      %p100 = por %p98, %p99
      %p101 = scmp.ne.s32.totalorder %s93, %s95
      %p102 = scmp.eq.s32.totalorder %s22, 3
      %p103 = por %p101, %p102
      %p104 = scmp.ne.s32.totalorder %s95, %s96
      %p105 = scmp.eq.s32.totalorder %s22, 0
      %p106 = por %p104, %p105
      %p107 = scmp.ne.s32.totalorder %s95, %s96
      %p108 = scmp.eq.s32.totalorder %s23, 3
      %p109 = por %p107, %p108
      %p111 = scmp.ne.s32.totalorder %s96, %s110
      %p112 = scmp.eq.s32.totalorder %s23, 0
      %p113 = por %p111, %p112
      %s115 = sadd.s32 %s114, 1
      %p118 = scmp.eq.s32.totalorder %s17, 3
      %p119 = scmp.ne.s32.totalorder %s114, %s116
      %p120 = scmp.eq.s32.totalorder %s17, 0
      %p121 = por %p119, %p120
      %p122 = scmp.ne.s32.totalorder %s114, %s116
      %p123 = scmp.eq.s32.totalorder %s22, 3
      %p124 = por %p122, %p123
      %p125 = scmp.ne.s32.totalorder %s116, %s117
      %p126 = scmp.eq.s32.totalorder %s22, 0
      %p127 = por %p125, %p126
      %p128 = scmp.ne.s32.totalorder %s116, %s117
      %p129 = scmp.eq.s32.totalorder %s23, 3
      %p130 = por %p128, %p129
      %p132 = scmp.ne.s32.totalorder %s117, %s131
      %p133 = scmp.eq.s32.totalorder %s23, 0
      %p134 = por %p132, %p133
      %s136 = sadd.s32 %s135, 1
      %p139 = scmp.eq.s32.totalorder %s17, 3
      %p140 = scmp.ne.s32.totalorder %s135, %s137
      %p141 = scmp.eq.s32.totalorder %s17, 0
      %p142 = por %p140, %p141
      %p143 = scmp.ne.s32.totalorder %s135, %s137
      %p144 = scmp.eq.s32.totalorder %s22, 3
      %p145 = por %p143, %p144
      %p146 = scmp.ne.s32.totalorder %s137, %s138
      %p147 = scmp.eq.s32.totalorder %s22, 0
      %p148 = por %p146, %p147
      %p149 = scmp.ne.s32.totalorder %s137, %s138
      %p150 = scmp.eq.s32.totalorder %s23, 3
      %p151 = por %p149, %p150
      %p153 = scmp.ne.s32.totalorder %s138, %s152
      %p154 = scmp.eq.s32.totalorder %s23, 0
      %p155 = por %p153, %p154
      %s157 = sadd.s32 %s156, 1
      %p160 = scmp.eq.s32.totalorder %s17, 3
      %p161 = scmp.ne.s32.totalorder %s156, %s158
      %p162 = scmp.eq.s32.totalorder %s17, 0
      %p163 = por %p161, %p162
      %p164 = scmp.ne.s32.totalorder %s156, %s158
      %p165 = scmp.eq.s32.totalorder %s22, 3
      %p166 = por %p164, %p165
      %p167 = scmp.ne.s32.totalorder %s158, %s159
      %p168 = scmp.eq.s32.totalorder %s22, 0
      %p169 = por %p167, %p168
      %p170 = scmp.ne.s32.totalorder %s158, %s159
      %p171 = scmp.eq.s32.totalorder %s23, 3
      %p172 = por %p170, %p171
      %p174 = scmp.ne.s32.totalorder %s159, %s173
      %p175 = scmp.eq.s32.totalorder %s23, 0
      %p176 = por %p174, %p175
      %s178 = sadd.s32 %s177, 1
      %p181 = scmp.eq.s32.totalorder %s17, 3
      %p182 = scmp.ne.s32.totalorder %s177, %s179
      %p183 = scmp.eq.s32.totalorder %s17, 0
      %p184 = por %p182, %p183
      %p185 = scmp.ne.s32.totalorder %s177, %s179
      %p186 = scmp.eq.s32.totalorder %s22, 3
      %p187 = por %p185, %p186
      %p188 = scmp.ne.s32.totalorder %s179, %s180
      %p189 = scmp.eq.s32.totalorder %s22, 0
      %p190 = por %p188, %p189
      %p191 = scmp.ne.s32.totalorder %s179, %s180
      %p192 = scmp.eq.s32.totalorder %s23, 3
      %p193 = por %p191, %p192
      %p195 = scmp.ne.s32.totalorder %s180, %s194
      %p196 = scmp.eq.s32.totalorder %s23, 0
      %p197 = por %p195, %p196
      %s198 = ssub.s32 %s24, %s36
      %p199 = scmp.eq.s32.totalorder %s198, 0
      %s201 = sadd.s32 %s200, 1
      %s202 = scalar_select %p199, %s200, %s201
      %p205 = pneg %p199
      %p206 = scmp.eq.s32.totalorder %s17, 3
      %p207 = por %p205, %p206
      %p208 = scmp.ne.s32.totalorder %s200, %s203
      %p209 = scmp.eq.s32.totalorder %s17, 0
      %p210 = por %p208, %p209
      %p211 = scmp.ne.s32.totalorder %s200, %s203
      %p212 = scmp.eq.s32.totalorder %s22, 3
      %p213 = por %p211, %p212
      %p214 = scmp.ne.s32.totalorder %s203, %s204
      %p215 = scmp.eq.s32.totalorder %s22, 0
      %p216 = por %p214, %p215
      %p217 = scmp.ne.s32.totalorder %s203, %s204
      %p218 = scmp.eq.s32.totalorder %s23, 3
      %p219 = por %p217, %p218
      %p221 = scmp.ne.s32.totalorder %s204, %s220
      %p222 = scmp.eq.s32.totalorder %s23, 0
      %p223 = por %p221, %p222
      %p224 = scmp.le.s32.totalorder 1, %s17
      %p225 = scmp.lt.s32.totalorder %s17, 5
      %p226 = pnand %p224, %p225
      %p227 = pneg %p226
      // Predicated region
      $region9: #{tpu_custom_call.1} parent=5 // pred_check
        _
      $region10: #{tpu_custom_call.1} parent=5 // pred_check_branch
        %229 = sbr.rel (%p226) target = $region12
      $region11: #{tpu_custom_call.1} parent=5 // pred_region
        %s230 = ssub.s32 %s17, 1
        // Predicated region
        $region13: #{tpu_custom_call.1} parent=11 // pred_check
          %p231 = pneg %p106
        $region14: #{tpu_custom_call.1} parent=11 // pred_check_branch
          %233 = sbr.rel (%p231) target = $region16
        $region15: #{tpu_custom_call.1} parent=11 // pred_region
          %s235 = ssub.s32 4096, 4096
          %236 = vsyncadd [#allocation7], %s235
          %s237 = sshll.u32 [#allocation6], 4
          %s238 = int_to_ptr.vmem [resolvable:$true] %s237
          %243 = dma.hbm_to_vmem [thread:$0]  %s2, 4096, %s238, [#allocation7], 128, 128, 8
        $region16: #{tpu_custom_call.1} parent=11 // pred_fallthru
          _
        // Predicated region
        $region17: #{tpu_custom_call.1} parent=11 // pred_check
          %p244 = pneg %p127
        $region18: #{tpu_custom_call.1} parent=11 // pred_check_branch
          %246 = sbr.rel (%p244) target = $region20
        $region19: #{tpu_custom_call.1} parent=11 // pred_region
          %s248 = ssub.s32 4096, 4096
          %249 = vsyncadd [#allocation7], %s248
          %s250 = sshll.u32 [#allocation8], 4
          %s251 = int_to_ptr.vmem [resolvable:$true] %s250
          %256 = dma.hbm_to_vmem [thread:$0]  %s3, 4096, %s251, [#allocation7], 128, 128, 8
        $region20: #{tpu_custom_call.1} parent=11 // pred_fallthru
          _
        // Predicated region
        $region21: #{tpu_custom_call.1} parent=11 // pred_check
          %p257 = pneg %p148
        $region22: #{tpu_custom_call.1} parent=11 // pred_check_branch
          %259 = sbr.rel (%p257) target = $region24
        $region23: #{tpu_custom_call.1} parent=11 // pred_region
          _
        $region24: #{tpu_custom_call.1} parent=11 // pred_fallthru
          _
        // Predicated region
        $region25: #{tpu_custom_call.1} parent=11 // pred_check
          %p260 = pneg %p169
        $region26: #{tpu_custom_call.1} parent=11 // pred_check_branch
          %262 = sbr.rel (%p260) target = $region28
        $region27: #{tpu_custom_call.1} parent=11 // pred_region
          _
        $region28: #{tpu_custom_call.1} parent=11 // pred_fallthru
          _
        // Predicated region
        $region29: #{tpu_custom_call.1} parent=11 // pred_check
          %p263 = pneg %p190
        $region30: #{tpu_custom_call.1} parent=11 // pred_check_branch
          %265 = sbr.rel (%p263) target = $region32
        $region31: #{tpu_custom_call.1} parent=11 // pred_region
          _
        $region32: #{tpu_custom_call.1} parent=11 // pred_fallthru
          _
      $region12: #{tpu_custom_call.1} parent=5 // pred_fallthru
        _
      %p266 = scmp.lt.s32.totalorder %s17, 4
      // Predicated region
      $region33: #{tpu_custom_call.1} parent=5 // pred_check
        %p267 = pneg %p266
      $region34: #{tpu_custom_call.1} parent=5 // pred_check_branch
        %269 = sbr.rel (%p267) target = $region36
      $region35: #{tpu_custom_call.1} parent=5 // pred_region
        // Predicated region
        $region37: #{tpu_custom_call.1} parent=35 // pred_check
          %p270 = pneg %p51
        $region38: #{tpu_custom_call.1} parent=35 // pred_check_branch
          %272 = sbr.rel (%p270) target = $region40
        $region39: #{tpu_custom_call.1} parent=35 // pred_region
          %s273 = sand.u32 %s41, 1
          %s274 = scalar_lea.sflag [#allocation4], %s273
          %s275 = sand.u32 %s41, 1
          %s276 = smul.addr %s275, 128
          %s277 = scalar_lea.vmem [#allocation3], %s276
          %s278 = smul.u32 16, %s24
          %s280 = ssub.s32 2048, 2048
          %281 = vsyncadd %s274, %s280
          %s282 = smul.addr %s278, 4
          %s283 = sadd.s32 %s25, %s282
          %s284 = smul.addr %s283, 64
          %s285 = scalar_lea.hbm %s0, %s284
          %s286 = sshll.u32 %s277, 4
          %s287 = int_to_ptr.vmem [resolvable:$true] %s286
          %292 = dma.hbm_to_vmem [thread:$0]  %s285, 2048, %s287, %s274, 128, 64, 4
        $region40: #{tpu_custom_call.1} parent=35 // pred_fallthru
          _
        // Predicated region
        $region41: #{tpu_custom_call.1} parent=35 // pred_check
          %p293 = pneg %p79
        $region42: #{tpu_custom_call.1} parent=35 // pred_check_branch
          %295 = sbr.rel (%p293) target = $region44
        $region43: #{tpu_custom_call.1} parent=35 // pred_region
          %s296 = sand.u32 %s69, 1
          %s297 = sand.u32 %s69, 1
          %s298 = smul.addr %s297, 16
          %s299 = scalar_lea.vmem [#allocation5], %s298
          %s300 = smul.u32 2, %s24
          %s301 = smul.addr %s300, 2
          %s302 = sadd.s32 %s25, %s301
          %s303 = smul.addr %s302, 8
          %s304 = scalar_lea.vmem %s1, %s303
          // Predicated region
          $region45: #{tpu_custom_call.1} parent=43 // pred_check
            _
          $region46: #{tpu_custom_call.1} parent=43 // pred_check_branch
            %306 = sbr.rel (0) target = $region48
          $region47: #{tpu_custom_call.1} parent=43 // pred_region
            // Predicated region
            $region49: #{tpu_custom_call.1} parent=47 // pred_check
              _
            $region50: #{tpu_custom_call.1} parent=47 // pred_check_branch
              %308 = sbr.rel (0) target = $region52
            $region51: #{tpu_custom_call.1} parent=47 // pred_region
              // Predicated region
              $region64: #{tpu_custom_call.1} parent=51 // pred_check
                _
              $region65: #{tpu_custom_call.1} parent=51 // pred_check_branch
                %325 = sbr.rel (0) target = $region67
              $region66: #{tpu_custom_call.1} parent=51 // pred_region
                loop: start=0, step=1, limit=1
                $region68: #{tpu_custom_call.1} parent=66 // loop_pre_header
                  _
                $region69: #{tpu_custom_call.1} parent=66 // loop_header
                  %s327 = sphi 0, %s331
                  %p328 = scmp.ge.s32.totalorder %s327, 1
                  %s332 = sphi %s304, %s304
                  %s333 = sphi %s299, %s299
                $region70: #{tpu_custom_call.1} parent=66 // loop_header_branch
                  %330 = sbr.rel (%p328) target = $region74
                $region71: #{tpu_custom_call.1} parent=66 // loop_body
                  %v334 = vld [vmem:[%s332] sm:$0xff]
                  %335 = vst [vmem:[%s333] sm:$0xff] %v334
                  %v336 = vld [vmem:[%s332 + $0x10] sm:$0xff]
                  %337 = vst [vmem:[%s333 + $0x8] sm:$0xff] %v336
                $region72: #{tpu_custom_call.1} parent=66 // loop_footer
                  %s331 = sadd.s32 1, %s327
                $region73: #{tpu_custom_call.1} parent=66 // loop_footer_branch
                  %326 = sbr.rel target = $region69
                $region74: #{tpu_custom_call.1} parent=66 // loop_exit
                  _
              $region67: #{tpu_custom_call.1} parent=51 // pred_fallthru
                _
              // Predicated region
              $region75: #{tpu_custom_call.1} parent=51 // pred_check
                _
              $region76: #{tpu_custom_call.1} parent=51 // pred_check_branch
                %339 = sbr.rel target = $region78
              $region77: #{tpu_custom_call.1} parent=51 // pred_region
                _
              $region78: #{tpu_custom_call.1} parent=51 // pred_fallthru
                _
            $region52: #{tpu_custom_call.1} parent=47 // pred_fallthru
              _
            // Predicated region
            $region53: #{tpu_custom_call.1} parent=47 // pred_check
              _
            $region54: #{tpu_custom_call.1} parent=47 // pred_check_branch
              %310 = sbr.rel target = $region56
            $region55: #{tpu_custom_call.1} parent=47 // pred_region
              loop: start=0, step=1, limit=1
              $region57: #{tpu_custom_call.1} parent=55 // loop_pre_header
                _
              $region58: #{tpu_custom_call.1} parent=55 // loop_header
                %s313 = sphi 0, %s317
                %p314 = scmp.ge.s32.totalorder %s313, 1
                %s318 = sphi %s304, %s304
                %s319 = sphi %s299, %s299
              $region59: #{tpu_custom_call.1} parent=55 // loop_header_branch
                %316 = sbr.rel (%p314) target = $region63
              $region60: #{tpu_custom_call.1} parent=55 // loop_body
                %v320 = vld [vmem:[%s318] sm:$0xff]
                %321 = vst [vmem:[%s319] sm:$0xff] %v320
                %v322 = vld [vmem:[%s318 + $0x10] sm:$0xff]
                %323 = vst [vmem:[%s319 + $0x8] sm:$0xff] %v322
              $region61: #{tpu_custom_call.1} parent=55 // loop_footer
                %s317 = sadd.s32 1, %s313
              $region62: #{tpu_custom_call.1} parent=55 // loop_footer_branch
                %312 = sbr.rel target = $region58
              $region63: #{tpu_custom_call.1} parent=55 // loop_exit
                _
            $region56: #{tpu_custom_call.1} parent=47 // pred_fallthru
              _
          $region48: #{tpu_custom_call.1} parent=43 // pred_fallthru
            _
          %340 = vnop
        $region44: #{tpu_custom_call.1} parent=35 // pred_fallthru
          _
      $region36: #{tpu_custom_call.1} parent=5 // pred_fallthru
        _
      %p341 = scmp.le.s32.totalorder 1, %s17
      %p342 = scmp.lt.s32.totalorder %s17, 5
      %p343 = pnand %p341, %p342
      %p344 = pneg %p343
      // Predicated region
      $region79: #{tpu_custom_call.1} parent=5 // pred_check
        _
      $region80: #{tpu_custom_call.1} parent=5 // pred_check_branch
        %346 = sbr.rel (%p343) target = $region82
      $region81: #{tpu_custom_call.1} parent=5 // pred_region
        %s347 = ssub.s32 %s17, 1
        %s348 = sand.u32 %s44, 1
        %s349 = scalar_lea.sflag [#allocation4], %s348
        %s350 = sand.u32 %s44, 1
        %s351 = smul.addr %s350, 128
        %s352 = scalar_lea.vmem [#allocation3], %s351
        // Predicated region
        $region83: #{tpu_custom_call.1} parent=81 // pred_check
          %p353 = pneg %p57
        $region84: #{tpu_custom_call.1} parent=81 // pred_check_branch
          %355 = sbr.rel (%p353) target = $region86
        $region85: #{tpu_custom_call.1} parent=81 // pred_region
          %356 = dma.done %s349, 2048
        $region86: #{tpu_custom_call.1} parent=81 // pred_fallthru
          _
        %s357 = sand.u32 %s72, 1
        %s358 = sand.u32 %s72, 1
        %s359 = smul.addr %s358, 16
        %s360 = scalar_lea.vmem [#allocation5], %s359
        // Predicated region
        $region87: #{tpu_custom_call.1} parent=81 // pred_check
          %p361 = pneg %p85
        $region88: #{tpu_custom_call.1} parent=81 // pred_check_branch
          %363 = sbr.rel (%p361) target = $region90
        $region89: #{tpu_custom_call.1} parent=81 // pred_region
          _
        $region90: #{tpu_custom_call.1} parent=81 // pred_fallthru
          _
        // Predicated region
        $region91: #{tpu_custom_call.1} parent=81 // pred_check
          %p364 = pneg %p106
        $region92: #{tpu_custom_call.1} parent=81 // pred_check_branch
          %366 = sbr.rel (%p364) target = $region94
        $region93: #{tpu_custom_call.1} parent=81 // pred_region
          %367 = dma.done [#allocation7], 4096
        $region94: #{tpu_custom_call.1} parent=81 // pred_fallthru
          _
        // Predicated region
        $region95: #{tpu_custom_call.1} parent=81 // pred_check
          %p368 = pneg %p127
        $region96: #{tpu_custom_call.1} parent=81 // pred_check_branch
          %370 = sbr.rel (%p368) target = $region98
        $region97: #{tpu_custom_call.1} parent=81 // pred_region
          %371 = dma.done [#allocation7], 4096
        $region98: #{tpu_custom_call.1} parent=81 // pred_fallthru
          _
        %s372 = sand.u32 %s44, 1
        %s373 = scalar_lea.sflag [#allocation4], %s372
        %s374 = sand.u32 %s44, 1
        %s375 = smul.addr %s374, 128
        %s376 = scalar_lea.vmem [#allocation3], %s375
        %p377 = pneg %p57
        %p378 = pneg %p54
        %s379 = sand.u32 %s72, 1
        %s380 = sand.u32 %s72, 1
        %s381 = smul.addr %s380, 16
        %s382 = scalar_lea.vmem [#allocation5], %s381
        %p383 = pneg %p85
        %p384 = pneg %p82
        %p385 = pneg %p106
        %p386 = pneg %p103
        %p387 = pneg %p127
        %p388 = pneg %p124
        %p389 = pneg %p148
        %p390 = pneg %p145
        %p391 = pneg %p169
        %p392 = pneg %p166
        %p393 = pneg %p190
        %p394 = pneg %p187
        %p395 = pneg %p216
        %p396 = pneg %p213
        %s397 = smul.u32 2, %s26
        %p398 = scmp.lt.s32.totalorder %s397, 3
        %s399 = scalar_select %p398, %s397, 3
        %s400 = smul.addr %s399, 8
        %s401 = scalar_lea.vmem %s7, %s400
        %s402 = smul.u32 16, %s26
        %s403 = smul.u32 2, %s26
        %s404 = smul.u32 2, %s26
        %p405 = scmp.lt.s32.totalorder %s404, 3
        %s406 = scalar_select %p405, %s404, 3
        %s407 = smul.addr %s406, 8
        %s408 = scalar_lea.vmem %s7, %s407
        %s409 = smul.u32 2, %s26
        %p411 = scmp.eq.s32.totalorder %s27, 0
        // Predicated region
        $region99: #{tpu_custom_call.1} parent=81 // pred_check
          %p412 = pneg %p411
        $region100: #{tpu_custom_call.1} parent=81 // pred_check_branch
          %414 = sbr.rel (%p412) target = $region102
        $region101: #{tpu_custom_call.1} parent=81 // pred_region
          %415 = vst [vmem:[#allocation2] sm:$0xff] 0.0
          %416 = vst [vmem:[#allocation2 + $0x8] sm:$0xff] 0.0
          %417 = vst [vmem:[#allocation2 + $0x10] sm:$0xff] 0.0
          %418 = vst [vmem:[#allocation2 + $0x18] sm:$0xff] 0.0
        $region102: #{tpu_custom_call.1} parent=81 // pred_fallthru
          _
        %v419 = vld [vmem:[%s352] sm:$0xf]
        %v420 = vld [vmem:[%s352 + $0x4] sm:$0xf]
        %v421 = vld [vmem:[%s352 + $0x8] sm:$0xf]
        %v422 = vld [vmem:[%s352 + $0xc] sm:$0xf]
        %v423 = vld [vmem:[%s352 + $0x10] sm:$0xf]
        %v424 = vld [vmem:[%s352 + $0x14] sm:$0xf]
        %v425 = vld [vmem:[%s352 + $0x18] sm:$0xf]
        %v426 = vld [vmem:[%s352 + $0x1c] sm:$0xf]
        %v427 = vld [vmem:[%s352 + $0x20] sm:$0xf]
        %v428 = vld [vmem:[%s352 + $0x24] sm:$0xf]
        %v429 = vld [vmem:[%s352 + $0x28] sm:$0xf]
        %v430 = vld [vmem:[%s352 + $0x2c] sm:$0xf]
        %v431 = vld [vmem:[%s352 + $0x30] sm:$0xf]
        %v432 = vld [vmem:[%s352 + $0x34] sm:$0xf]
        %v433 = vld [vmem:[%s352 + $0x38] sm:$0xf]
        %v434 = vld [vmem:[%s352 + $0x3c] sm:$0xf]
        %v435 = vld [vmem:[%s352 + $0x40] sm:$0xf]
        %v436 = vld [vmem:[%s352 + $0x44] sm:$0xf]
        %v437 = vld [vmem:[%s352 + $0x48] sm:$0xf]
        %v438 = vld [vmem:[%s352 + $0x4c] sm:$0xf]
        %v439 = vld [vmem:[%s352 + $0x50] sm:$0xf]
        %v440 = vld [vmem:[%s352 + $0x54] sm:$0xf]
        %v441 = vld [vmem:[%s352 + $0x58] sm:$0xf]
        %v442 = vld [vmem:[%s352 + $0x5c] sm:$0xf]
        %v443 = vld [vmem:[%s352 + $0x60] sm:$0xf]
        %v444 = vld [vmem:[%s352 + $0x64] sm:$0xf]
        %v445 = vld [vmem:[%s352 + $0x68] sm:$0xf]
        %v446 = vld [vmem:[%s352 + $0x6c] sm:$0xf]
        %v447 = vld [vmem:[%s352 + $0x70] sm:$0xf]
        %v448 = vld [vmem:[%s352 + $0x74] sm:$0xf]
        %v449 = vld [vmem:[%s352 + $0x78] sm:$0xf]
        %v450 = vld [vmem:[%s352 + $0x7c] sm:$0xf]
        %v451 = vunpack.c.l.bf16 %v419
        %v452 = vunpack.c.l.bf16 %v420
        %v453 = vunpack.c.l.bf16 %v421
        %v454 = vunpack.c.l.bf16 %v422
        %v455 = vunpack.c.l.bf16 %v423
        %v456 = vunpack.c.l.bf16 %v424
        %v457 = vunpack.c.l.bf16 %v425
        %v458 = vunpack.c.l.bf16 %v426
        %v459 = vunpack.c.l.bf16 %v427
        %v460 = vunpack.c.l.bf16 %v428
        %v461 = vunpack.c.l.bf16 %v429
        %v462 = vunpack.c.l.bf16 %v430
        %v463 = vunpack.c.l.bf16 %v431
        %v464 = vunpack.c.l.bf16 %v432
        %v465 = vunpack.c.l.bf16 %v433
        %v466 = vunpack.c.l.bf16 %v434
        %v467 = vunpack.c.l.bf16 %v435
        %v468 = vunpack.c.l.bf16 %v436
        %v469 = vunpack.c.l.bf16 %v437
        %v470 = vunpack.c.l.bf16 %v438
        %v471 = vunpack.c.l.bf16 %v439
        %v472 = vunpack.c.l.bf16 %v440
        %v473 = vunpack.c.l.bf16 %v441
        %v474 = vunpack.c.l.bf16 %v442
        %v475 = vunpack.c.l.bf16 %v443
        %v476 = vunpack.c.l.bf16 %v444
        %v477 = vunpack.c.l.bf16 %v445
        %v478 = vunpack.c.l.bf16 %v446
        %v479 = vunpack.c.l.bf16 %v447
        %v480 = vunpack.c.l.bf16 %v448
        %v481 = vunpack.c.l.bf16 %v449
        %v482 = vunpack.c.l.bf16 %v450
        %v483 = vadd.f32 %v451, %v452
        %v484 = vrot.slane %v483, 4
        %v485 = vadd.f32 %v483, %v484
        %v486 = vrot.slane %v485, 2
        %v487 = vadd.f32 %v485, %v486
        %v488 = vrot.slane %v487, 1
        %v489 = vadd.f32 %v487, %v488
        %v490 = vadd.f32 %v453, %v454
        %v491 = vrot.slane %v490, 4
        %v492 = vadd.f32 %v490, %v491
        %v493 = vrot.slane %v492, 2
        %v494 = vadd.f32 %v492, %v493
        %v495 = vrot.slane %v494, 1
        %v496 = vadd.f32 %v494, %v495
        %v497 = vadd.f32 %v455, %v456
        %v498 = vrot.slane %v497, 4
        %v499 = vadd.f32 %v497, %v498
        %v500 = vrot.slane %v499, 2
        %v501 = vadd.f32 %v499, %v500
        %v502 = vrot.slane %v501, 1
        %v503 = vadd.f32 %v501, %v502
        %v504 = vadd.f32 %v457, %v458
        %v505 = vrot.slane %v504, 4
        %v506 = vadd.f32 %v504, %v505
        %v507 = vrot.slane %v506, 2
        %v508 = vadd.f32 %v506, %v507
        %v509 = vrot.slane %v508, 1
        %v510 = vadd.f32 %v508, %v509
        %v511 = vadd.f32 %v459, %v460
        %v512 = vrot.slane %v511, 4
        %v513 = vadd.f32 %v511, %v512
        %v514 = vrot.slane %v513, 2
        %v515 = vadd.f32 %v513, %v514
        %v516 = vrot.slane %v515, 1
        %v517 = vadd.f32 %v515, %v516
        %v518 = vadd.f32 %v461, %v462
        %v519 = vrot.slane %v518, 4
        %v520 = vadd.f32 %v518, %v519
        %v521 = vrot.slane %v520, 2
        %v522 = vadd.f32 %v520, %v521
        %v523 = vrot.slane %v522, 1
        %v524 = vadd.f32 %v522, %v523
        %v525 = vadd.f32 %v463, %v464
        %v526 = vrot.slane %v525, 4
        %v527 = vadd.f32 %v525, %v526
        %v528 = vrot.slane %v527, 2
        %v529 = vadd.f32 %v527, %v528
        %v530 = vrot.slane %v529, 1
        %v531 = vadd.f32 %v529, %v530
        %v532 = vadd.f32 %v465, %v466
        %v533 = vrot.slane %v532, 4
        %v534 = vadd.f32 %v532, %v533
        %v535 = vrot.slane %v534, 2
        %v536 = vadd.f32 %v534, %v535
        %v537 = vrot.slane %v536, 1
        %v538 = vadd.f32 %v536, %v537
        %v539 = vadd.f32 %v467, %v468
        %v540 = vrot.slane %v539, 4
        %v541 = vadd.f32 %v539, %v540
        %v542 = vrot.slane %v541, 2
        %v543 = vadd.f32 %v541, %v542
        %v544 = vrot.slane %v543, 1
        %v545 = vadd.f32 %v543, %v544
        %v546 = vadd.f32 %v469, %v470
        %v547 = vrot.slane %v546, 4
        %v548 = vadd.f32 %v546, %v547
        %v549 = vrot.slane %v548, 2
        %v550 = vadd.f32 %v548, %v549
        %v551 = vrot.slane %v550, 1
        %v552 = vadd.f32 %v550, %v551
        %v553 = vadd.f32 %v471, %v472
        %v554 = vrot.slane %v553, 4
        %v555 = vadd.f32 %v553, %v554
        %v556 = vrot.slane %v555, 2
        %v557 = vadd.f32 %v555, %v556
        %v558 = vrot.slane %v557, 1
        %v559 = vadd.f32 %v557, %v558
        %v560 = vadd.f32 %v473, %v474
        %v561 = vrot.slane %v560, 4
        %v562 = vadd.f32 %v560, %v561
        %v563 = vrot.slane %v562, 2
        %v564 = vadd.f32 %v562, %v563
        %v565 = vrot.slane %v564, 1
        %v566 = vadd.f32 %v564, %v565
        %v567 = vadd.f32 %v475, %v476
        %v568 = vrot.slane %v567, 4
        %v569 = vadd.f32 %v567, %v568
        %v570 = vrot.slane %v569, 2
        %v571 = vadd.f32 %v569, %v570
        %v572 = vrot.slane %v571, 1
        %v573 = vadd.f32 %v571, %v572
        %v574 = vadd.f32 %v477, %v478
        %v575 = vrot.slane %v574, 4
        %v576 = vadd.f32 %v574, %v575
        %v577 = vrot.slane %v576, 2
        %v578 = vadd.f32 %v576, %v577
        %v579 = vrot.slane %v578, 1
        %v580 = vadd.f32 %v578, %v579
        %v581 = vadd.f32 %v479, %v480
        %v582 = vrot.slane %v581, 4
        %v583 = vadd.f32 %v581, %v582
        %v584 = vrot.slane %v583, 2
        %v585 = vadd.f32 %v583, %v584
        %v586 = vrot.slane %v585, 1
        %v587 = vadd.f32 %v585, %v586
        %v588 = vadd.f32 %v481, %v482
        %v589 = vrot.slane %v588, 4
        %v590 = vadd.f32 %v588, %v589
        %v591 = vrot.slane %v590, 2
        %v592 = vadd.f32 %v590, %v591
        %v593 = vrot.slane %v592, 1
        %v594 = vadd.f32 %v592, %v593
        %v595 = vpack.c.bf16 %v489, %v489
        %v596 = vpack.c.bf16 %v496, %v496
        %v597 = vpack.c.bf16 %v503, %v503
        %v598 = vpack.c.bf16 %v510, %v510
        %v599 = vpack.c.bf16 %v517, %v517
        %v600 = vpack.c.bf16 %v524, %v524
        %v601 = vpack.c.bf16 %v531, %v531
        %v602 = vpack.c.bf16 %v538, %v538
        %v603 = vpack.c.bf16 %v545, %v545
        %v604 = vpack.c.bf16 %v552, %v552
        %v605 = vpack.c.bf16 %v559, %v559
        %v606 = vpack.c.bf16 %v566, %v566
        %v607 = vpack.c.bf16 %v573, %v573
        %v608 = vpack.c.bf16 %v580, %v580
        %v609 = vpack.c.bf16 %v587, %v587
        %v610 = vpack.c.bf16 %v594, %v594
        %v611 = vld [vmem:[%s360] sm:$0xff]
        %v612 = vld [vmem:[%s360 + $0x8] sm:$0xff]
        %v613 = vpack.c.bf16 %v612, %v611
        %s614 = smul.u32 %s27, 128
        %v615 = vld [vmem:[#allocation2] sm:$0xff]
        %v616 = vld [vmem:[#allocation2 + $0x8] sm:$0xff]
        %v617 = vld [vmem:[#allocation2 + $0x10] sm:$0xff]
        %v618 = vld [vmem:[#allocation2 + $0x18] sm:$0xff]
        %s619 = sshra.s32 %s614, 3
        %s620 = sand.u32 %s614, 7
        %s621 = smul.u32 %s619, 2
        %s622 = smul.addr %s621, 4
        %s623 = scalar_lea.vmem [#allocation6], %s622
        %v624 = vld [vmem:[%s623] sm:$0xff]
        %v625 = vld [vmem:[%s623 + $0x8] sm:$0xff]
        %v626 = vld [vmem:[%s623 + $0x10] sm:$0xff]
        %v627 = vld [vmem:[%s623 + $0x18] sm:$0xff]
        %v628 = vld [vmem:[%s623 + $0x20] sm:$0xff]
        %v629 = vld [vmem:[%s623 + $0x28] sm:$0xff]
        %v630 = vld [vmem:[%s623 + $0x30] sm:$0xff]
        %v631 = vld [vmem:[%s623 + $0x38] sm:$0xff]
        %v632 = vld [vmem:[%s623 + $0x40] sm:$0xff]
        %v633 = vld [vmem:[%s623 + $0x48] sm:$0xff]
        %v634 = vld [vmem:[%s623 + $0x50] sm:$0xff]
        %v635 = vld [vmem:[%s623 + $0x58] sm:$0xff]
        %v636 = vld [vmem:[%s623 + $0x60] sm:$0xff]
        %v637 = vld [vmem:[%s623 + $0x68] sm:$0xff]
        %v638 = vld [vmem:[%s623 + $0x70] sm:$0xff]
        %v639 = vld [vmem:[%s623 + $0x78] sm:$0xff]
        %s640 = smul.addr %s621, 4
        %s641 = scalar_lea.vmem [#allocation8], %s640
        %v642 = vld [vmem:[%s641] sm:$0xff]
        %v643 = vld [vmem:[%s641 + $0x8] sm:$0xff]
        %v644 = vld [vmem:[%s641 + $0x10] sm:$0xff]
        %v645 = vld [vmem:[%s641 + $0x18] sm:$0xff]
        %v646 = vld [vmem:[%s641 + $0x20] sm:$0xff]
        %v647 = vld [vmem:[%s641 + $0x28] sm:$0xff]
        %v648 = vld [vmem:[%s641 + $0x30] sm:$0xff]
        %v649 = vld [vmem:[%s641 + $0x38] sm:$0xff]
        %v650 = vld [vmem:[%s641 + $0x40] sm:$0xff]
        %v651 = vld [vmem:[%s641 + $0x48] sm:$0xff]
        %v652 = vld [vmem:[%s641 + $0x50] sm:$0xff]
        %v653 = vld [vmem:[%s641 + $0x58] sm:$0xff]
        %v654 = vld [vmem:[%s641 + $0x60] sm:$0xff]
        %v655 = vld [vmem:[%s641 + $0x68] sm:$0xff]
        %v656 = vld [vmem:[%s641 + $0x70] sm:$0xff]
        %v657 = vld [vmem:[%s641 + $0x78] sm:$0xff]
        %v674 = vunpack.c.l.b16 %v642
        %v675 = vunpack.c.h.b16 %v642
        %v676 = vunpack.c.l.b16 %v643
        %v677 = vunpack.c.h.b16 %v643
        %v678 = vunpack.c.l.b16 %v644
        %v679 = vunpack.c.h.b16 %v644
        %v680 = vunpack.c.l.b16 %v645
        %v681 = vunpack.c.h.b16 %v645
        %v682 = vunpack.c.l.b16 %v646
        %v683 = vunpack.c.h.b16 %v646
        %v684 = vunpack.c.l.b16 %v647
        %v685 = vunpack.c.h.b16 %v647
        %v686 = vunpack.c.l.b16 %v648
        %v687 = vunpack.c.h.b16 %v648
        %v688 = vunpack.c.l.b16 %v649
        %v689 = vunpack.c.h.b16 %v649
        %v690 = vunpack.c.l.b16 %v650
        %v691 = vunpack.c.h.b16 %v650
        %v692 = vunpack.c.l.b16 %v651
        %v693 = vunpack.c.h.b16 %v651
        %v694 = vunpack.c.l.b16 %v652
        %v695 = vunpack.c.h.b16 %v652
        %v696 = vunpack.c.l.b16 %v653
        %v697 = vunpack.c.h.b16 %v653
        %v698 = vunpack.c.l.b16 %v654
        %v699 = vunpack.c.h.b16 %v654
        %v700 = vunpack.c.l.b16 %v655
        %v701 = vunpack.c.h.b16 %v655
        %v702 = vunpack.c.l.b16 %v656
        %v703 = vunpack.c.h.b16 %v656
        %v704 = vunpack.c.l.b16 %v657
        %v705 = vunpack.c.h.b16 %v657
        %v706 = vpack.c.b16 %v676, %v674
        %v707 = vpack.c.b16 %v677, %v675
        %v708 = vpack.c.b16 %v680, %v678
        %v709 = vpack.c.b16 %v681, %v679
        %v710 = vpack.c.b16 %v684, %v682
        %v711 = vpack.c.b16 %v685, %v683
        %v712 = vpack.c.b16 %v688, %v686
        %v713 = vpack.c.b16 %v689, %v687
        %v714 = vpack.c.b16 %v692, %v690
        %v715 = vpack.c.b16 %v693, %v691
        %v716 = vpack.c.b16 %v696, %v694
        %v717 = vpack.c.b16 %v697, %v695
        %v718 = vpack.c.b16 %v700, %v698
        %v719 = vpack.c.b16 %v701, %v699
        %v720 = vpack.c.b16 %v704, %v702
        %v721 = vpack.c.b16 %v705, %v703
        %738 = vmatprep.subr.bf16.mxu0 %v707
        %739 = vmatpush1.bf16.msra.mxu0 %v706
        %740 = vmatprep.subr.bf16.mxu0 %v709
        %741 = vmatpush1.bf16.msra.mxu0 %v708
        %742 = vmatprep.subr.bf16.mxu0 %v711
        %743 = vmatpush1.bf16.msra.mxu0 %v710
        %744 = vmatprep.subr.bf16.mxu0 %v713
        %745 = vmatpush1.bf16.msra.mxu0 %v712
        %746 = vmatprep.subr.bf16.mxu0 %v715
        %747 = vmatpush1.bf16.msra.mxu0 %v714
        %748 = vmatprep.subr.bf16.mxu0 %v717
        %749 = vmatpush1.bf16.msra.mxu0 %v716
        %750 = vmatprep.subr.bf16.mxu0 %v719
        %751 = vmatpush1.bf16.msra.mxu0 %v718
        %752 = vmatprep.subr.bf16.mxu0 %v721
        %753 = vmatpush1.bf16.msra.mxu0 %v720
        %754 = vmatprep.subr.bf16.mxu0 0
        %755 = vmatpush1.bf16.msra.mxu0 0
        %756 = vmatprep.subr.bf16.mxu0 0
        %757 = vmatpush1.bf16.msra.mxu0 0
        %758 = vmatprep.subr.bf16.mxu0 0
        %759 = vmatpush1.bf16.msra.mxu0 0
        %760 = vmatprep.subr.bf16.mxu0 0
        %761 = vmatpush1.bf16.msra.mxu0 0
        %762 = vmatprep.subr.bf16.mxu0 0
        %763 = vmatpush1.bf16.msra.mxu0 0
        %764 = vmatprep.subr.bf16.mxu0 0
        %765 = vmatpush1.bf16.msra.mxu0 0
        %766 = vmatprep.subr.bf16.mxu0 0
        %767 = vmatpush1.bf16.msra.mxu0 0
        %768 = vmatprep.subr.bf16.mxu0 0
        %769 = vmatpush1.bf16.msra.mxu0 0
        %770 = vmatprep.mubr.bf16.mxu0 0
        %771 = vmatmul.mubr.bf16.gmra.mrb[0].mxu0 %v613
        %v772 = vpop.f32.mrb[0].mxu0
        %v773 = vadd.f32 0.0, %v772
        %v774 = vpop.f32.mrb[0].mxu0
        %v775 = vadd.f32 0.0, %v774
        %v776 = vpop.f32.mrb[0].mxu0
        %v777 = vadd.f32 0.0, %v776
        %v778 = vpop.f32.mrb[0].mxu0
        %v779 = vadd.f32 0.0, %v778
        %780 = vdwg.mxu0
        %v797 = vunpack.c.l.b16 %v595
        %v798 = vunpack.c.l.b16 %v596
        %v799 = vunpack.c.l.b16 %v597
        %v800 = vunpack.c.l.b16 %v598
        %v801 = vunpack.c.l.b16 %v599
        %v802 = vunpack.c.l.b16 %v600
        %v803 = vunpack.c.l.b16 %v601
        %v804 = vunpack.c.l.b16 %v602
        %v805 = vunpack.c.l.b16 %v603
        %v806 = vunpack.c.l.b16 %v604
        %v807 = vunpack.c.l.b16 %v605
        %v808 = vunpack.c.l.b16 %v606
        %v809 = vunpack.c.l.b16 %v607
        %v810 = vunpack.c.l.b16 %v608
        %v811 = vunpack.c.l.b16 %v609
        %v812 = vunpack.c.l.b16 %v610
        %vm813 = vcmask 1041409
        %v814 = vsel %vm813, %v798, %v797
        %vm815 = vcmask 1042434
        %v816 = vsel %vm815, %v799, %v814
        %vm817 = vcmask 1043459
        %v818 = vsel %vm817, %v800, %v816
        %vm819 = vcmask 1044484
        %v820 = vsel %vm819, %v801, %v818
        %vm821 = vcmask 1045509
        %v822 = vsel %vm821, %v802, %v820
        %vm823 = vcmask 1046534
        %v824 = vsel %vm823, %v803, %v822
        %vm825 = vcmask 1047559
        %v826 = vsel %vm825, %v804, %v824
        %v827 = vsel %vm813, %v806, %v805
        %v828 = vsel %vm815, %v807, %v827
        %v829 = vsel %vm817, %v808, %v828
        %v830 = vsel %vm819, %v809, %v829
        %v831 = vsel %vm821, %v810, %v830
        %v832 = vsel %vm823, %v811, %v831
        %v833 = vsel %vm825, %v812, %v832
        %v834 = vpack.c.b16 %v833, %v826
        %v852 = vunpack.c.l.b16 %v624
        %v853 = vunpack.c.h.b16 %v624
        %v854 = vunpack.c.l.b16 %v625
        %v855 = vunpack.c.h.b16 %v625
        %v856 = vunpack.c.l.b16 %v626
        %v857 = vunpack.c.h.b16 %v626
        %v858 = vunpack.c.l.b16 %v627
        %v859 = vunpack.c.h.b16 %v627
        %v860 = vunpack.c.l.b16 %v628
        %v861 = vunpack.c.h.b16 %v628
        %v862 = vunpack.c.l.b16 %v629
        %v863 = vunpack.c.h.b16 %v629
        %v864 = vunpack.c.l.b16 %v630
        %v865 = vunpack.c.h.b16 %v630
        %v866 = vunpack.c.l.b16 %v631
        %v867 = vunpack.c.h.b16 %v631
        %v868 = vunpack.c.l.b16 %v632
        %v869 = vunpack.c.h.b16 %v632
        %v870 = vunpack.c.l.b16 %v633
        %v871 = vunpack.c.h.b16 %v633
        %v872 = vunpack.c.l.b16 %v634
        %v873 = vunpack.c.h.b16 %v634
        %v874 = vunpack.c.l.b16 %v635
        %v875 = vunpack.c.h.b16 %v635
        %v876 = vunpack.c.l.b16 %v636
        %v877 = vunpack.c.h.b16 %v636
        %v878 = vunpack.c.l.b16 %v637
        %v879 = vunpack.c.h.b16 %v637
        %v880 = vunpack.c.l.b16 %v638
        %v881 = vunpack.c.h.b16 %v638
        %v882 = vunpack.c.l.b16 %v639
        %v883 = vunpack.c.h.b16 %v639
        %v884 = vpack.c.b16 %v854, %v852
        %v885 = vpack.c.b16 %v855, %v853
        %v886 = vpack.c.b16 %v858, %v856
        %v887 = vpack.c.b16 %v859, %v857
        %v888 = vpack.c.b16 %v862, %v860
        %v889 = vpack.c.b16 %v863, %v861
        %v890 = vpack.c.b16 %v866, %v864
        %v891 = vpack.c.b16 %v867, %v865
        %v892 = vpack.c.b16 %v870, %v868
        %v893 = vpack.c.b16 %v871, %v869
        %v894 = vpack.c.b16 %v874, %v872
        %v895 = vpack.c.b16 %v875, %v873
        %v896 = vpack.c.b16 %v878, %v876
        %v897 = vpack.c.b16 %v879, %v877
        %v898 = vpack.c.b16 %v882, %v880
        %v899 = vpack.c.b16 %v883, %v881
        %916 = vmatprep.subr.bf16.mxu0 %v885
        %917 = vmatpush1.bf16.msra.mxu0 %v884
        %918 = vmatprep.subr.bf16.mxu0 %v887
        %919 = vmatpush1.bf16.msra.mxu0 %v886
        %920 = vmatprep.subr.bf16.mxu0 %v889
        %921 = vmatpush1.bf16.msra.mxu0 %v888
        %922 = vmatprep.subr.bf16.mxu0 %v891
        %923 = vmatpush1.bf16.msra.mxu0 %v890
        %924 = vmatprep.subr.bf16.mxu0 %v893
        %925 = vmatpush1.bf16.msra.mxu0 %v892
        %926 = vmatprep.subr.bf16.mxu0 %v895
        %927 = vmatpush1.bf16.msra.mxu0 %v894
        %928 = vmatprep.subr.bf16.mxu0 %v897
        %929 = vmatpush1.bf16.msra.mxu0 %v896
        %930 = vmatprep.subr.bf16.mxu0 %v899
        %931 = vmatpush1.bf16.msra.mxu0 %v898
        %932 = vmatprep.subr.bf16.mxu0 0
        %933 = vmatpush1.bf16.msra.mxu0 0
        %934 = vmatprep.subr.bf16.mxu0 0
        %935 = vmatpush1.bf16.msra.mxu0 0
        %936 = vmatprep.subr.bf16.mxu0 0
        %937 = vmatpush1.bf16.msra.mxu0 0
        %938 = vmatprep.subr.bf16.mxu0 0
        %939 = vmatpush1.bf16.msra.mxu0 0
        %940 = vmatprep.subr.bf16.mxu0 0
        %941 = vmatpush1.bf16.msra.mxu0 0
        %942 = vmatprep.subr.bf16.mxu0 0
        %943 = vmatpush1.bf16.msra.mxu0 0
        %944 = vmatprep.subr.bf16.mxu0 0
        %945 = vmatpush1.bf16.msra.mxu0 0
        %946 = vmatprep.subr.bf16.mxu0 0
        %947 = vmatpush1.bf16.msra.mxu0 0
        %948 = vmatprep.mubr.bf16.mxu0 0
        %949 = vmatmul.mubr.bf16.gmra.mrb[0].mxu0 %v834
        %v950 = vpop.f32.mrb[0].mxu0
        %v951 = vadd.f32 %v773, %v950
        %v952 = vpop.f32.mrb[0].mxu0
        %v953 = vadd.f32 %v775, %v952
        %v954 = vpop.f32.mrb[0].mxu0
        %v955 = vadd.f32 %v777, %v954
        %v956 = vpop.f32.mrb[0].mxu0
        %v957 = vadd.f32 %v779, %v956
        %958 = vdwg.mxu0
        %v959 = vadd.f32 %v615, %v951
        %v960 = vadd.f32 %v616, %v953
        %v961 = vadd.f32 %v617, %v955
        %v962 = vadd.f32 %v618, %v957
        %963 = vst [vmem:[#allocation2] sm:$0xff] %v959
        %964 = vst [vmem:[#allocation2 + $0x8] sm:$0xff] %v960
        %965 = vst [vmem:[#allocation2 + $0x10] sm:$0xff] %v961
        %966 = vst [vmem:[#allocation2 + $0x18] sm:$0xff] %v962
        %p967 = scmp.eq.s32.totalorder %s27, 1
        // Predicated region
        $region103: #{tpu_custom_call.1} parent=81 // pred_check
          %p968 = pneg %p967
        $region104: #{tpu_custom_call.1} parent=81 // pred_check_branch
          %970 = sbr.rel (%p968) target = $region106
        $region105: #{tpu_custom_call.1} parent=81 // pred_region
          %v971 = vld [vmem:[#allocation2] sm:$0xff]
          %v972 = vld [vmem:[#allocation2 + $0x8] sm:$0xff]
          %v973 = vld [vmem:[#allocation2 + $0x10] sm:$0xff]
          %v974 = vld [vmem:[#allocation2 + $0x18] sm:$0xff]
          %v975 = vld [vmem:[%s4] sm:$0x3]
          %v977 = vlaneseq
          %v978 = vshrl.u32 %v977, 7
          %v979 = vsub.s32 0, %v978
          %v980 = vrot.slane %v975, %v979
          %v981 = vlaneseq
          %v982 = vshrl.u32 %v981, 7
          %v983 = vsub.s32 1, %v982
          %v984 = vrot.slane %v975, %v983
          %v987 = vadd.f32 %v971, %v980
          %v988 = vadd.f32 %v972, %v984
          %v989 = vadd.f32 %v973, %v980
          %v990 = vadd.f32 %v974, %v984
          %v991 = vmax.f32 %v987, 0.0
          %v992 = vmax.f32 %v988, 0.0
          %v993 = vmax.f32 %v989, 0.0
          %v994 = vmax.f32 %v990, 0.0
          %v995 = vpack.c.bf16 %v993, %v991
          %v996 = vpack.c.bf16 %v994, %v992
          %v997 = vld [vmem:[%s5] sm:$0xf]
          %v998 = vld [vmem:[%s5 + $0x4] sm:$0xf]
          %v999 = vld [vmem:[%s5 + $0x8] sm:$0xf]
          %v1000 = vld [vmem:[%s5 + $0xc] sm:$0xf]
          %v1001 = vld [vmem:[%s5 + $0x10] sm:$0xf]
          %v1002 = vld [vmem:[%s5 + $0x14] sm:$0xf]
          %v1003 = vld [vmem:[%s5 + $0x18] sm:$0xf]
          %v1004 = vld [vmem:[%s5 + $0x1c] sm:$0xf]
          %v1005 = vld [vmem:[%s5 + $0x20] sm:$0xf]
          %v1006 = vld [vmem:[%s5 + $0x24] sm:$0xf]
          %v1007 = vld [vmem:[%s5 + $0x28] sm:$0xf]
          %v1008 = vld [vmem:[%s5 + $0x2c] sm:$0xf]
          %v1009 = vld [vmem:[%s5 + $0x30] sm:$0xf]
          %v1010 = vld [vmem:[%s5 + $0x34] sm:$0xf]
          %v1011 = vld [vmem:[%s5 + $0x38] sm:$0xf]
          %v1012 = vld [vmem:[%s5 + $0x3c] sm:$0xf]
          %v1013 = vld [vmem:[%s5 + $0x40] sm:$0xf]
          %v1014 = vld [vmem:[%s5 + $0x44] sm:$0xf]
          %v1015 = vld [vmem:[%s5 + $0x48] sm:$0xf]
          %v1016 = vld [vmem:[%s5 + $0x4c] sm:$0xf]
          %v1017 = vld [vmem:[%s5 + $0x50] sm:$0xf]
          %v1018 = vld [vmem:[%s5 + $0x54] sm:$0xf]
          %v1019 = vld [vmem:[%s5 + $0x58] sm:$0xf]
          %v1020 = vld [vmem:[%s5 + $0x5c] sm:$0xf]
          %v1021 = vld [vmem:[%s5 + $0x60] sm:$0xf]
          %v1022 = vld [vmem:[%s5 + $0x64] sm:$0xf]
          %v1023 = vld [vmem:[%s5 + $0x68] sm:$0xf]
          %v1024 = vld [vmem:[%s5 + $0x6c] sm:$0xf]
          %v1025 = vld [vmem:[%s5 + $0x70] sm:$0xf]
          %v1026 = vld [vmem:[%s5 + $0x74] sm:$0xf]
          %v1027 = vld [vmem:[%s5 + $0x78] sm:$0xf]
          %v1028 = vld [vmem:[%s5 + $0x7c] sm:$0xf]
          %v1029 = vld [vmem:[%s6] sm:$0x1]
          %v1031 = vlaneseq
          %v1032 = vshrl.u32 %v1031, 7
          %v1033 = vsub.s32 0, %v1032
          %v1034 = vrot.slane %v1029, %v1033
          %v1068 = vunpack.c.l.b16 %v997
          %v1069 = vunpack.c.l.b16 %v998
          %v1070 = vunpack.c.l.b16 %v999
          %v1071 = vunpack.c.l.b16 %v1000
          %v1072 = vunpack.c.l.b16 %v1001
          %v1073 = vunpack.c.l.b16 %v1002
          %v1074 = vunpack.c.l.b16 %v1003
          %v1075 = vunpack.c.l.b16 %v1004
          %v1076 = vunpack.c.l.b16 %v1005
          %v1077 = vunpack.c.l.b16 %v1006
          %v1078 = vunpack.c.l.b16 %v1007
          %v1079 = vunpack.c.l.b16 %v1008
          %v1080 = vunpack.c.l.b16 %v1009
          %v1081 = vunpack.c.l.b16 %v1010
          %v1082 = vunpack.c.l.b16 %v1011
          %v1083 = vunpack.c.l.b16 %v1012
          %v1084 = vunpack.c.l.b16 %v1013
          %v1085 = vunpack.c.l.b16 %v1014
          %v1086 = vunpack.c.l.b16 %v1015
          %v1087 = vunpack.c.l.b16 %v1016
          %v1088 = vunpack.c.l.b16 %v1017
          %v1089 = vunpack.c.l.b16 %v1018
          %v1090 = vunpack.c.l.b16 %v1019
          %v1091 = vunpack.c.l.b16 %v1020
          %v1092 = vunpack.c.l.b16 %v1021
          %v1093 = vunpack.c.l.b16 %v1022
          %v1094 = vunpack.c.l.b16 %v1023
          %v1095 = vunpack.c.l.b16 %v1024
          %v1096 = vunpack.c.l.b16 %v1025
          %v1097 = vunpack.c.l.b16 %v1026
          %v1098 = vunpack.c.l.b16 %v1027
          %v1099 = vunpack.c.l.b16 %v1028
          %v1100 = vpack.c.b16 %v1069, %v1068
          %v1101 = vpack.c.b16 %v1071, %v1070
          %v1102 = vpack.c.b16 %v1073, %v1072
          %v1103 = vpack.c.b16 %v1075, %v1074
          %v1104 = vpack.c.b16 %v1077, %v1076
          %v1105 = vpack.c.b16 %v1079, %v1078
          %v1106 = vpack.c.b16 %v1081, %v1080
          %v1107 = vpack.c.b16 %v1083, %v1082
          %v1108 = vpack.c.b16 %v1085, %v1084
          %v1109 = vpack.c.b16 %v1087, %v1086
          %v1110 = vpack.c.b16 %v1089, %v1088
          %v1111 = vpack.c.b16 %v1091, %v1090
          %v1112 = vpack.c.b16 %v1093, %v1092
          %v1113 = vpack.c.b16 %v1095, %v1094
          %v1114 = vpack.c.b16 %v1097, %v1096
          %v1115 = vpack.c.b16 %v1099, %v1098
          %1132 = vmatprep.subr.bf16.mxu0 0
          %1133 = vmatpush1.bf16.msra.mxu0 %v1100
          %1134 = vmatprep.subr.bf16.mxu0 0
          %1135 = vmatpush1.bf16.msra.mxu0 %v1101
          %1136 = vmatprep.subr.bf16.mxu0 0
          %1137 = vmatpush1.bf16.msra.mxu0 %v1102
          %1138 = vmatprep.subr.bf16.mxu0 0
          %1139 = vmatpush1.bf16.msra.mxu0 %v1103
          %1140 = vmatprep.subr.bf16.mxu0 0
          %1141 = vmatpush1.bf16.msra.mxu0 %v1104
          %1142 = vmatprep.subr.bf16.mxu0 0
          %1143 = vmatpush1.bf16.msra.mxu0 %v1105
          %1144 = vmatprep.subr.bf16.mxu0 0
          %1145 = vmatpush1.bf16.msra.mxu0 %v1106
          %1146 = vmatprep.subr.bf16.mxu0 0
          %1147 = vmatpush1.bf16.msra.mxu0 %v1107
          %1148 = vmatprep.subr.bf16.mxu0 0
          %1149 = vmatpush1.bf16.msra.mxu0 %v1108
          %1150 = vmatprep.subr.bf16.mxu0 0
          %1151 = vmatpush1.bf16.msra.mxu0 %v1109
          %1152 = vmatprep.subr.bf16.mxu0 0
          %1153 = vmatpush1.bf16.msra.mxu0 %v1110
          %1154 = vmatprep.subr.bf16.mxu0 0
          %1155 = vmatpush1.bf16.msra.mxu0 %v1111
          %1156 = vmatprep.subr.bf16.mxu0 0
          %1157 = vmatpush1.bf16.msra.mxu0 %v1112
          %1158 = vmatprep.subr.bf16.mxu0 0
          %1159 = vmatpush1.bf16.msra.mxu0 %v1113
          %1160 = vmatprep.subr.bf16.mxu0 0
          %1161 = vmatpush1.bf16.msra.mxu0 %v1114
          %1162 = vmatprep.subr.bf16.mxu0 0
          %1163 = vmatpush1.bf16.msra.mxu0 %v1115
          %1164 = vmatprep.mubr.bf16.mxu0 %v996
          %1165 = vmatmul.mubr.bf16.gmra.mrb[0].mxu0 %v995
          %v1166 = vpop.f32.mrb[0].mxu0
          %v1167 = vadd.f32 %v1034, %v1166
          %v1168 = vpop.f32.mrb[0].mxu0
          %v1169 = vpop.f32.mrb[0].mxu0
          %v1170 = vadd.f32 %v1034, %v1169
          %v1171 = vpop.f32.mrb[0].mxu0
          %1172 = vdwg.mxu0
          %vm1173 = vcmask 31744
          %1174 = vst.msk [vmem:[%s408] sm:$0xff] %vm1173, %v1167
          %1175 = vst.msk [vmem:[%s408 + $0x8] sm:$0xff] %vm1173, %v1170
        $region106: #{tpu_custom_call.1} parent=81 // pred_fallthru
          _
        %s1176 = smul.u32 2, %s26
        %p1177 = scmp.lt.s32.totalorder %s1176, 3
        %s1178 = scalar_select %p1177, %s1176, 3
        %s1179 = smul.addr %s1178, 8
        %s1180 = scalar_lea.vmem %s7, %s1179
        // Predicated region
        $region107: #{tpu_custom_call.1} parent=81 // pred_check
          %p1181 = pneg %p213
        $region108: #{tpu_custom_call.1} parent=81 // pred_check_branch
          %1183 = sbr.rel (%p1181) target = $region110
        $region109: #{tpu_custom_call.1} parent=81 // pred_region
          %s1184 = smul.u32 2, %s26
        $region110: #{tpu_custom_call.1} parent=81 // pred_fallthru
          _
      $region82: #{tpu_custom_call.1} parent=5 // pred_fallthru
        _
      %p1185 = scmp.le.s32.totalorder 2, %s17
      // Predicated region
      $region111: #{tpu_custom_call.1} parent=5 // pred_check
        %p1186 = pneg %p1185
      $region112: #{tpu_custom_call.1} parent=5 // pred_check_branch
        %1188 = sbr.rel (%p1186) target = $region114
      $region113: #{tpu_custom_call.1} parent=5 // pred_region
        %s1189 = ssub.s32 %s17, 2
        // Predicated region
        $region115: #{tpu_custom_call.1} parent=113 // pred_check
          %p1190 = pneg %p219
        $region116: #{tpu_custom_call.1} parent=113 // pred_check_branch
          %1192 = sbr.rel (%p1190) target = $region118
        $region117: #{tpu_custom_call.1} parent=113 // pred_region
          %s1193 = smul.u32 2, %s28
          %p1194 = scmp.lt.s32.totalorder %s1193, 3
          %s1195 = scalar_select %p1194, %s1193, 3
          %s1196 = smul.addr %s1195, 8
          %s1197 = scalar_lea.vmem %s7, %s1196
        $region118: #{tpu_custom_call.1} parent=113 // pred_fallthru
          _
      $region114: #{tpu_custom_call.1} parent=5 // pred_fallthru
        _
    $region6: #{tpu_custom_call.1} parent=1 // loop_footer
      %s21 = sadd.s32 1, %s17
    $region7: #{tpu_custom_call.1} parent=1 // loop_footer_branch
      %16 = sbr.rel target = $region3
    $region8: #{tpu_custom_call.1} parent=1 // loop_exit
      _
    %1198 = vsyncpa [#allocation4], 1
    %s1199 = scalar_lea.sflag [#allocation4], 1
    %1200 = vsyncpa %s1199, 1
    %1201 = vsyncpa [#allocation7], 1

</llo_original>
